<compile_context>
chip_gen: v6e
topology: v6e:2x2x1
jax: 0.10.0
libtpu: 0.0.40
codegen_flags: <defaults>
</compile_context>

<pallas_src>
import jax
import jax.numpy as jnp
from jax.experimental import pallas as pl
from jax.experimental.pallas import tpu as pltpu


def _round_up(n, m):
    return ((n + m - 1) // m) * m


# ------------------------------- kernel ------------------------------------ #

def _nn_kernel(x_ref, w_ref, b_ref, w2_relu_ref, w2_lin_ref, o_ref):
    """Fused MLP (+folded skip & bias) for one batch tile.

    pre    = x @ W_cat + b_cat                          (tb, Wc)  -- MXU
    logit  = sum(relu(pre)*w2_relu + pre*w2_lin, -1)    (tb,)     -- VPU + lane reduce
    out    = logit                                       (1, tb)  -- lane-dense store
    """
    x = x_ref[...]                                                # (tb, D_in) f32
    pre = jnp.dot(x, w_ref[...],
                  preferred_element_type=jnp.float32) + b_ref[...]   # (tb, Wc)
    weighted = (jnp.maximum(pre, 0.0) * w2_relu_ref[...]
                + pre * w2_lin_ref[...])                          # (tb, Wc)
    logits = jnp.sum(weighted, axis=-1)                           # (tb,)
    o_ref[...] = logits[None, :]                                  # (1, tb)


# ------------------------------- wrapper ----------------------------------- #

def nn_classifier_forward(x, params, *, add_skip, tb_max=512):
    """x: (B, D_in) f32. Returns logits, shape (B,) (scalar if B == 1)."""
    B, D_in = x.shape
    H = params["w1"].shape[1]
    f32 = jnp.float32

    # ---- fold weights: skip path + final bias merged into one extra column ----
    w1 = params["w1"].astype(f32)                     # (D_in, H)
    b1 = params["b1"].astype(f32)                     # (1, H)
    w2_row = params["w2"].astype(f32).reshape(1, H)   # second-layer weights
    b2 = params["b2"].astype(f32).reshape(())

    if add_skip:
        ws2 = params["ws2"].astype(f32).reshape(())   # Linear(1,1) weight (scalar)
        bs2 = params["bs2"].astype(f32).reshape(())
        bs1 = params["bs1"].astype(f32).reshape(())
        extra_w = params["ws1"].astype(f32) * ws2     # (D_in, 1)
        extra_b = (b2 + bs1 * ws2 + bs2).reshape(1, 1)
    else:
        extra_w = jnp.zeros((D_in, 1), f32)
        extra_b = b2.reshape(1, 1)

    w_cat = jnp.concatenate([w1, extra_w], axis=1)                       # (D_in, H+1)
    b_cat = jnp.concatenate([b1, extra_b], axis=1)                       # (1, H+1)
    w2_relu = jnp.concatenate([w2_row, jnp.zeros((1, 1), f32)], axis=1)  # ReLU cols
    w2_lin = jnp.concatenate([jnp.zeros((1, H), f32),
                              jnp.ones((1, 1), f32)], axis=1)            # pass-through col
    wcols = w_cat.shape[1]

    # ---- batch tiling: big tiles, VMEM-aware, ragged B via zero padding ----
    # Keep the double-buffered x tile under ~8 MiB (v5e scoped default = 16 MiB).
    x_budget = 8 << 20
    tb_fit = max(128, (x_budget // (2 * D_in * 4)) // 128 * 128)
    tb_cap = min(tb_max, tb_fit)

    b8 = _round_up(B, 8)
    if b8 <= tb_cap:
        tb = b8                        # single tile: block == full output last dim
    else:
        tb = tb_cap                    # multi-tile: tb is a multiple of 128
    B_pad = _round_up(B, tb)
    if B_pad != B:
        x = jnp.pad(x, ((0, B_pad - B), (0, 0)))
    x = x.astype(f32)
    grid = (B_pad // tb,)

    vmem = pltpu.MemorySpace.VMEM

    out = pl.pallas_call(
        _nn_kernel,
        out_shape=jax.ShapeDtypeStruct((1, B_pad), f32),
        grid=grid,
        in_specs=[
            pl.BlockSpec((tb, D_in), lambda i: (i, 0), memory_space=vmem),    # x tile
            pl.BlockSpec((D_in, wcols), lambda i: (0, 0), memory_space=vmem),  # W_cat
            pl.BlockSpec((1, wcols), lambda i: (0, 0), memory_space=vmem),     # b_cat
            pl.BlockSpec((1, wcols), lambda i: (0, 0), memory_space=vmem),     # w2_relu
            pl.BlockSpec((1, wcols), lambda i: (0, 0), memory_space=vmem),     # w2_lin
        ],
        out_specs=pl.BlockSpec((1, tb), lambda i: (0, i), memory_space=vmem),
        compiler_params=pltpu.CompilerParams(
            dimension_semantics=("parallel",)),
    )(x, w_cat, b_cat, w2_relu, w2_lin)

    logits = out.reshape(-1)[:B]
    return jnp.squeeze(logits)    # matches torch .squeeze(): scalar for B == 1


# ------------------------- param init (deterministic) ---------------------- #

def init_params(key, d_in, hidden, add_skip):
    """Mimics nn.Linear default init: U(-1/sqrt(fan_in), +1/sqrt(fan_in)).
    Weights stored transposed as (in, out)."""
    ks = jax.random.split(key, 8)

    def lin(kw, kb, fan_in, fan_out):
        bound = 1.0 / jnp.sqrt(fan_in)
        w = jax.random.uniform(kw, (fan_in, fan_out), jnp.float32, -bound, bound)
        b = jax.random.uniform(kb, (1, fan_out), jnp.float32, -bound, bound)
        return w, b

    w1, b1 = lin(ks[0], ks[1], d_in, hidden)
    w2, b2 = lin(ks[2], ks[3], hidden, 1)
    params = {"w1": w1, "b1": b1, "w2": w2, "b2": b2}
    if add_skip:
        ws1, bs1 = lin(ks[4], ks[5], d_in, 1)
        ws2, bs2 = lin(ks[6], ks[7], 1, 1)
        params.update({"ws1": ws1, "bs1": bs1, "ws2": ws2, "bs2": bs2})
    return params


def reference_forward(x, params, add_skip):
    h = jnp.maximum(x @ params["w1"] + params["b1"], 0.0)
    logits = h @ params["w2"] + params["b2"]
    if add_skip:
        skip = x @ params["ws1"] + params["bs1"]
        skip = skip @ params["ws2"] + params["bs2"]
        logits = logits + skip
    return jnp.squeeze(logits)


# --------------------------------- main ------------------------------------ #

if __name__ == "__main__":
    D_IN, HIDDEN = 256, 32   # small shapes; module default D_in=1536 also works

    key = jax.random.PRNGKey(0)
    kx, kp = jax.random.split(key)

    # B=13 exercises the ragged-batch padding path (single tile);
    # B=1040 exercises the multi-tile grid with tb=512 and tail padding.
    for B in (13, 1040):
        x = jax.random.normal(kx, (B, D_IN), jnp.float32)
        for add_skip in (False, True):
            params = init_params(kp, D_IN, HIDDEN, add_skip)
            out = nn_classifier_forward(x, params, add_skip=add_skip)
            out = jax.block_until_ready(out)
            ref = reference_forward(x, params, add_skip)
            assert out.shape == (B,), (B, out.shape)
            assert jnp.allclose(out, ref, atol=1e-4, rtol=1e-4), \
                f"mismatch vs reference (B={B}, add_skip={add_skip})"

    print("KERNEL_OK")
</pallas_src>

<mosaic_0001>
module attributes {stable_mosaic.version = 11 : i64} {
  func.func @_nn_kernel(%arg0: i32, %arg1: memref<16x256xf32, #tpu.memory_space<vmem>>, %arg2: memref<256x33xf32, #tpu.memory_space<vmem>>, %arg3: memref<1x33xf32, #tpu.memory_space<vmem>>, %arg4: memref<1x33xf32, #tpu.memory_space<vmem>>, %arg5: memref<1x33xf32, #tpu.memory_space<vmem>>, %arg6: memref<1x16xf32, #tpu.memory_space<vmem>>) attributes {dimension_semantics = [#tpu.dimension_semantics<parallel>], iteration_bounds = array<i64: 1>, scalar_prefetch = 0 : i64, scratch_operands = 0 : i64, tpu.core_type = #tpu.core_type<tc>, window_params = [{transform_indices = @transform_0, window_bounds = array<i64: 16, 256>}, {pipeline_mode = #tpu.pipeline_mode<synchronous>, transform_indices = @transform_1, window_bounds = array<i64: 256, 33>}, {pipeline_mode = #tpu.pipeline_mode<synchronous>, transform_indices = @transform_2, window_bounds = array<i64: 1, 33>}, {pipeline_mode = #tpu.pipeline_mode<synchronous>, transform_indices = @transform_3, window_bounds = array<i64: 1, 33>}, {pipeline_mode = #tpu.pipeline_mode<synchronous>, transform_indices = @transform_4, window_bounds = array<i64: 1, 33>}, {transform_indices = @transform_5, window_bounds = array<i64: 1, 16>}]} {
    %c0 = arith.constant 0 : index
    %c0_0 = arith.constant 0 : index
    %0 = vector.load %arg1[%c0, %c0_0] : memref<16x256xf32, #tpu.memory_space<vmem>>, vector<16x256xf32>
    %c0_1 = arith.constant 0 : index
    %c0_2 = arith.constant 0 : index
    %1 = vector.load %arg2[%c0_1, %c0_2] : memref<256x33xf32, #tpu.memory_space<vmem>>, vector<256x33xf32>
    %cst = arith.constant dense<0.000000e+00> : vector<16x33xf32>
    %2 = tpu.matmul %0, %1, %cst {dimension_numbers = #tpu.dot_dimension_numbers<[1], [0], [0], [1], [0, 0, 1, 1], [], []>} : vector<16x256xf32>, vector<256x33xf32>, vector<16x33xf32> -> vector<16x33xf32>
    %c0_3 = arith.constant 0 : index
    %c0_4 = arith.constant 0 : index
    %3 = vector.load %arg3[%c0_3, %c0_4] : memref<1x33xf32, #tpu.memory_space<vmem>>, vector<1x33xf32>
    %4 = vector.broadcast %3 : vector<1x33xf32> to vector<16x33xf32>
    %5 = arith.addf %2, %4 : vector<16x33xf32>
    %cst_5 = arith.constant 0.000000e+00 : f32
    %6 = vector.broadcast %cst_5 : f32 to vector<16x33xf32>
    %7 = arith.maximumf %5, %6 : vector<16x33xf32>
    %c0_6 = arith.constant 0 : index
    %c0_7 = arith.constant 0 : index
    %8 = vector.load %arg4[%c0_6, %c0_7] : memref<1x33xf32, #tpu.memory_space<vmem>>, vector<1x33xf32>
    %9 = vector.broadcast %8 : vector<1x33xf32> to vector<16x33xf32>
    %10 = arith.mulf %7, %9 : vector<16x33xf32>
    %c0_8 = arith.constant 0 : index
    %c0_9 = arith.constant 0 : index
    %11 = vector.load %arg5[%c0_8, %c0_9] : memref<1x33xf32, #tpu.memory_space<vmem>>, vector<1x33xf32>
    %12 = vector.broadcast %11 : vector<1x33xf32> to vector<16x33xf32>
    %13 = arith.mulf %5, %12 : vector<16x33xf32>
    %14 = arith.addf %10, %13 : vector<16x33xf32>
    %cst_10 = arith.constant dense<0.000000e+00> : vector<16xf32>
    %15 = vector.multi_reduction <add>, %14, %cst_10 [1] : vector<16x33xf32> to vector<16xf32>
    %16 = vector.shape_cast %15 : vector<16xf32> to vector<1x16xf32>
    %c0_11 = arith.constant 0 : index
    %c0_12 = arith.constant 0 : index
    %17 = vector.load %arg6[%c0_11, %c0_12] : memref<1x16xf32, #tpu.memory_space<vmem>>, vector<1x16xf32>
    tpu.vector_store %arg6[%c0_11, %c0_12], %16 {strides = array<i32>} : memref<1x16xf32, #tpu.memory_space<vmem>>, vector<1x16xf32>,
    return
  }
  func.func @transform_0(%arg0: i32) -> (i32, i32) {
    %c0_i32 = arith.constant 0 : i32
    %c0_i32_0 = arith.constant 0 : i32
    return %arg0, %c0_i32 : i32, i32
  }
  func.func @transform_1(%arg0: i32) -> (i32, i32) {
    %c0_i32 = arith.constant 0 : i32
    %c0_i32_0 = arith.constant 0 : i32
    %c0_i32_1 = arith.constant 0 : i32
    return %c0_i32, %c0_i32_0 : i32, i32
  }
  func.func @transform_2(%arg0: i32) -> (i32, i32) {
    %c0_i32 = arith.constant 0 : i32
    %c0_i32_0 = arith.constant 0 : i32
    %c0_i32_1 = arith.constant 0 : i32
    return %c0_i32, %c0_i32_0 : i32, i32
  }
  func.func @transform_3(%arg0: i32) -> (i32, i32) {
    %c0_i32 = arith.constant 0 : i32
    %c0_i32_0 = arith.constant 0 : i32
    %c0_i32_1 = arith.constant 0 : i32
    return %c0_i32, %c0_i32_0 : i32, i32
  }
  func.func @transform_4(%arg0: i32) -> (i32, i32) {
    %c0_i32 = arith.constant 0 : i32
    %c0_i32_0 = arith.constant 0 : i32
    %c0_i32_1 = arith.constant 0 : i32
    return %c0_i32, %c0_i32_0 : i32, i32
  }
  func.func @transform_5(%arg0: i32) -> (i32, i32) {
    %c0_i32 = arith.constant 0 : i32
    %c0_i32_0 = arith.constant 0 : i32
    return %c0_i32, %arg0 : i32, i32
  }
}

</mosaic_0001>

<llo_original>
// kernel: tpu_custom_call.1
$region0: #{tpu_custom_call.1}
  #allocation0 [shape = 'u32[]', space=smem, size = 0x4, offset = 0x4, fixed_abs, tag = 'smem constant byte address 0x4 - core index']
  #allocation1 [shape = 'u32[144,128]{1,0:T(1,128)}', space=vmem, size = 0x12000, scoped, tag = 'internal scratch']
  %s0 = inlined_call_operand.vmem [shape: f32[16,256], index: 0, kind: input, shape index: {}]
  %s1 = inlined_call_operand.vmem [shape: f32[256,33], index: 1, kind: input, shape index: {}]
  %s2 = inlined_call_operand.vmem [shape: f32[1,33], index: 2, kind: input, shape index: {}]
  %s3 = inlined_call_operand.vmem [shape: f32[1,33], index: 3, kind: input, shape index: {}]
  %s4 = inlined_call_operand.vmem [shape: f32[1,33], index: 4, kind: input, shape index: {}]
  %s5 = inlined_call_operand.hbm [shape: f32[1,16], index: 5, kind: output, shape index: {}]
  %s6 = sld [smem:[#allocation0]]
  $region30: #{tpu_custom_call.1} parent=0
    _
  %s8 = ssub.s32 1, %s6
  %s9 = scalar_select 0, %s8, %s6
  $region1: #{tpu_custom_call.1} parent=0
    #allocation2 [shape = 'u8[512]{0}', space=vmem, size = 0x400, scoped, tag = 'output window, operand 0, single buffered']
    #allocation3 [shape = 's32[1]{0}', space=sflag, size = 0x4, scoped, tag = 'scoped memory for tpu_custom_call.1']
    %10 = vsyncpa [#allocation3], 0
    // Predicated region
    $region2: #{tpu_custom_call.1} parent=1 // pred_check
      _
    $region3: #{tpu_custom_call.1} parent=1 // pred_check_branch
      %12 = sbr.rel (0) target = $region5
    $region4: #{tpu_custom_call.1} parent=1 // pred_region
      _
    $region5: #{tpu_custom_call.1} parent=1 // pred_fallthru
      _
    // Predicated region
    $region6: #{tpu_custom_call.1} parent=1 // pred_check
      _
    $region7: #{tpu_custom_call.1} parent=1 // pred_check_branch
      %14 = sbr.rel (0) target = $region9
    $region8: #{tpu_custom_call.1} parent=1 // pred_region
      _
    $region9: #{tpu_custom_call.1} parent=1 // pred_fallthru
      _
    // Predicated region
    $region10: #{tpu_custom_call.1} parent=1 // pred_check
      _
    $region11: #{tpu_custom_call.1} parent=1 // pred_check_branch
      %16 = sbr.rel (0) target = $region13
    $region12: #{tpu_custom_call.1} parent=1 // pred_region
      _
    $region13: #{tpu_custom_call.1} parent=1 // pred_fallthru
      _
    // Predicated region
    $region14: #{tpu_custom_call.1} parent=1 // pred_check
      _
    $region15: #{tpu_custom_call.1} parent=1 // pred_check_branch
      %18 = sbr.rel (0) target = $region17
    $region16: #{tpu_custom_call.1} parent=1 // pred_region
      _
    $region17: #{tpu_custom_call.1} parent=1 // pred_fallthru
      _
    // Predicated region
    $region18: #{tpu_custom_call.1} parent=1 // pred_check
      _
    $region19: #{tpu_custom_call.1} parent=1 // pred_check_branch
      %20 = sbr.rel (0) target = $region21
    $region20: #{tpu_custom_call.1} parent=1 // pred_region
      _
    $region21: #{tpu_custom_call.1} parent=1 // pred_fallthru
      _
    %v21 = vld [vmem:[%s0] sm:$0xff]
    %v22 = vld [vmem:[%s0 + $0x8] sm:$0xff]
    %v23 = vld [vmem:[%s0 + $0x10] sm:$0xff]
    %v24 = vld [vmem:[%s0 + $0x18] sm:$0xff]
    %v25 = vld [vmem:[%s1] sm:$0xff]
    %v26 = vld [vmem:[%s1 + $0x8] sm:$0xff]
    %v27 = vld [vmem:[%s1 + $0x10] sm:$0xff]
    %v28 = vld [vmem:[%s1 + $0x18] sm:$0xff]
    %v29 = vld [vmem:[%s1 + $0x20] sm:$0xff]
    %v30 = vld [vmem:[%s1 + $0x28] sm:$0xff]
    %v31 = vld [vmem:[%s1 + $0x30] sm:$0xff]
    %v32 = vld [vmem:[%s1 + $0x38] sm:$0xff]
    %v33 = vld [vmem:[%s1 + $0x40] sm:$0xff]
    %v34 = vld [vmem:[%s1 + $0x48] sm:$0xff]
    %v35 = vld [vmem:[%s1 + $0x50] sm:$0xff]
    %v36 = vld [vmem:[%s1 + $0x58] sm:$0xff]
    %v37 = vld [vmem:[%s1 + $0x60] sm:$0xff]
    %v38 = vld [vmem:[%s1 + $0x68] sm:$0xff]
    %v39 = vld [vmem:[%s1 + $0x70] sm:$0xff]
    %v40 = vld [vmem:[%s1 + $0x78] sm:$0xff]
    %v41 = vld [vmem:[%s1 + $0x80] sm:$0xff]
    %v42 = vld [vmem:[%s1 + $0x88] sm:$0xff]
    %v43 = vld [vmem:[%s1 + $0x90] sm:$0xff]
    %v44 = vld [vmem:[%s1 + $0x98] sm:$0xff]
    %v45 = vld [vmem:[%s1 + $0xa0] sm:$0xff]
    %v46 = vld [vmem:[%s1 + $0xa8] sm:$0xff]
    %v47 = vld [vmem:[%s1 + $0xb0] sm:$0xff]
    %v48 = vld [vmem:[%s1 + $0xb8] sm:$0xff]
    %v49 = vld [vmem:[%s1 + $0xc0] sm:$0xff]
    %v50 = vld [vmem:[%s1 + $0xc8] sm:$0xff]
    %v51 = vld [vmem:[%s1 + $0xd0] sm:$0xff]
    %v52 = vld [vmem:[%s1 + $0xd8] sm:$0xff]
    %v53 = vld [vmem:[%s1 + $0xe0] sm:$0xff]
    %v54 = vld [vmem:[%s1 + $0xe8] sm:$0xff]
    %v55 = vld [vmem:[%s1 + $0xf0] sm:$0xff]
    %v56 = vld [vmem:[%s1 + $0xf8] sm:$0xff]
    %v57 = vld [vmem:[%s2] sm:$0x1]
    %v59 = vlaneseq
    %v60 = vshrl.u32 %v59, 7
    %v61 = vsub.s32 0, %v60
    %v62 = vrot.slane %v57, %v61
    %64 = vmatprep.subr.mxu0 0.0
    %65 = vmatpush1.msra.mxu0 %v40
    %66 = vmatprep.subr.mxu0 0.0
    %67 = vmatpush1.msra.mxu0 %v39
    %68 = vmatprep.subr.mxu0 0.0
    %69 = vmatpush1.msra.mxu0 %v38
    %70 = vmatprep.subr.mxu0 0.0
    %71 = vmatpush1.msra.mxu0 %v37
    %72 = vmatprep.subr.mxu0 0.0
    %73 = vmatpush1.msra.mxu0 %v36
    %74 = vmatprep.subr.mxu0 0.0
    %75 = vmatpush1.msra.mxu0 %v35
    %76 = vmatprep.subr.mxu0 0.0
    %77 = vmatpush1.msra.mxu0 %v34
    %78 = vmatprep.subr.mxu0 0.0
    %79 = vmatpush1.msra.mxu0 %v33
    %80 = vmatprep.subr.mxu0 0.0
    %81 = vmatpush1.msra.mxu0 %v32
    %82 = vmatprep.subr.mxu0 0.0
    %83 = vmatpush1.msra.mxu0 %v31
    %84 = vmatprep.subr.mxu0 0.0
    %85 = vmatpush1.msra.mxu0 %v30
    %86 = vmatprep.subr.mxu0 0.0
    %87 = vmatpush1.msra.mxu0 %v29
    %88 = vmatprep.subr.mxu0 0.0
    %89 = vmatpush1.msra.mxu0 %v28
    %90 = vmatprep.subr.mxu0 0.0
    %91 = vmatpush1.msra.mxu0 %v27
    %92 = vmatprep.subr.mxu0 0.0
    %93 = vmatpush1.msra.mxu0 %v26
    %94 = vmatprep.subr.mxu0 0.0
    %95 = vmatpush1.msra.mxu0 %v25
    %96 = vmatprep.subr.mxu0 0.0
    %97 = vmatpush2.msra.mxu0 %v56
    %98 = vmatprep.subr.mxu0 0.0
    %99 = vmatpush2.msra.mxu0 %v55
    %100 = vmatprep.subr.mxu0 0.0
    %101 = vmatpush2.msra.mxu0 %v54
    %102 = vmatprep.subr.mxu0 0.0
    %103 = vmatpush2.msra.mxu0 %v53
    %104 = vmatprep.subr.mxu0 0.0
    %105 = vmatpush2.msra.mxu0 %v52
    %106 = vmatprep.subr.mxu0 0.0
    %107 = vmatpush2.msra.mxu0 %v51
    %108 = vmatprep.subr.mxu0 0.0
    %109 = vmatpush2.msra.mxu0 %v50
    %110 = vmatprep.subr.mxu0 0.0
    %111 = vmatpush2.msra.mxu0 %v49
    %112 = vmatprep.subr.mxu0 0.0
    %113 = vmatpush2.msra.mxu0 %v48
    %114 = vmatprep.subr.mxu0 0.0
    %115 = vmatpush2.msra.mxu0 %v47
    %116 = vmatprep.subr.mxu0 0.0
    %117 = vmatpush2.msra.mxu0 %v46
    %118 = vmatprep.subr.mxu0 0.0
    %119 = vmatpush2.msra.mxu0 %v45
    %120 = vmatprep.subr.mxu0 0.0
    %121 = vmatpush2.msra.mxu0 %v44
    %122 = vmatprep.subr.mxu0 0.0
    %123 = vmatpush2.msra.mxu0 %v43
    %124 = vmatprep.subr.mxu0 0.0
    %125 = vmatpush2.msra.mxu0 %v42
    %126 = vmatprep.subr.mxu0 0.0
    %127 = vmatpush2.msra.mxu0 %v41
    %128 = vmatprep.mubr.f32.mxu0 %v22
    %129 = vmatmul.mubr.f32.gmra.mxu0 %v21
    %v130 = vpop.f32.mrf.mxu0
    %v131 = vadd.f32 %v62, %v130
    %v132 = vpop.f32.mrf.mxu0
    %133 = vmatprep.mubr.f32.mxu0 %v24
    %134 = vmatmul.mubr.f32.gmra.mxu0 %v23
    %v135 = vpop.f32.mrf.mxu0
    %v136 = vadd.f32 %v62, %v135
    %v137 = vpop.f32.mrf.mxu0
    %138 = vdwg.mxu0
    %v139 = vmax.f32 %v131, 0.0
    %v140 = vmax.f32 %v136, 0.0
    %v141 = vld [vmem:[%s3] sm:$0x1]
    %v143 = vlaneseq
    %v144 = vshrl.u32 %v143, 7
    %v145 = vsub.s32 0, %v144
    %v146 = vrot.slane %v141, %v145
    %v148 = vmul.f32 %v139, %v146
    %v149 = vmul.f32 %v140, %v146
    %v150 = vld [vmem:[%s4] sm:$0x1]
    %v152 = vlaneseq
    %v153 = vshrl.u32 %v152, 7
    %v154 = vsub.s32 0, %v153
    %v155 = vrot.slane %v150, %v154
    %v157 = vmul.f32 %v131, %v155
    %v158 = vmul.f32 %v136, %v155
    %v159 = vadd.f32 %v148, %v157
    %v160 = vadd.f32 %v149, %v158
    %vm161 = vcmask 269312
    %v162 = vsel %vm161, %v159, 0.0
    %163 = vadd.xlane.f32.xlu0 %v162
    %v164 = vpop.xlane.xlu0 %163
    %v165 = vsel %vm161, %v160, 0.0
    %166 = vadd.xlane.f32.xlu0 %v165
    %v167 = vpop.xlane.xlu0 %166
    %v170 = vlaneseq
    %v171 = vand.u32 %v170, 127
    %v172 = vlaneseq
    %v173 = vshrl.u32 %v172, 7
    %v174 = vsub.s32 %v171, %v173
    %v175 = vrot.slane %v164, %v174
    %v176 = vadd.s32 %v171, 4294967288
    %v177 = vlaneseq
    %v178 = vshrl.u32 %v177, 7
    %v179 = vsub.s32 %v176, %v178
    %v180 = vrot.slane %v167, %v179
    %vm181 = vcmask 130112
    %v182 = vsel %vm181, %v180, %v175
    %vm184 = vcmask 122880
    %185 = vst.msk [vmem:[#allocation2] sm:$0x1] %vm184, %v182
    // Predicated region
    $region22: #{tpu_custom_call.1} parent=1 // pred_check
      _
    $region23: #{tpu_custom_call.1} parent=1 // pred_check_branch
      %187 = sbr.rel (0) target = $region25
    $region24: #{tpu_custom_call.1} parent=1 // pred_region
      %s189 = ssub.s32 16, 16
      %190 = vsyncadd [#allocation3], %s189
      %s192 = sshll.u32 [#allocation2], 4
      %s193 = int_to_ptr.vmem [resolvable:$true] %s192
      %195 = dma.vmem_to_hbm [thread:$0]  %s193, 16, %s5, [#allocation3]
    $region25: #{tpu_custom_call.1} parent=1 // pred_fallthru
      _
    // Predicated region
    $region26: #{tpu_custom_call.1} parent=1 // pred_check
      _
    $region27: #{tpu_custom_call.1} parent=1 // pred_check_branch
      %197 = sbr.rel (0) target = $region29
    $region28: #{tpu_custom_call.1} parent=1 // pred_region
      %198 = dma.done [#allocation3], 16
    $region29: #{tpu_custom_call.1} parent=1 // pred_fallthru
      _
    %199 = vsyncpa [#allocation3], 1

</llo_original>
